<compile_context>
chip_gen: v6e
topology: v6e:2x2x1
jax: 0.10.0
libtpu: 0.0.40
codegen_flags: <defaults>
</compile_context>

<pallas_src>
import functools
import math

import jax
import jax.numpy as jnp
from jax.experimental import pallas as pl
from jax.experimental.pallas import tpu as pltpu


# ---------------------------------------------------------------------------
# Pass 1: support = x @ W   (x cast f32 -> bf16 per tile, f32 MXU accumulation)
# ---------------------------------------------------------------------------
def _support_kernel(x_ref, w_ref, o_ref):
    x_bf = x_ref[...].astype(jnp.bfloat16)
    o_ref[...] = jnp.dot(
        x_bf, w_ref[...], preferred_element_type=jnp.float32
    ).astype(o_ref.dtype)


# ---------------------------------------------------------------------------
# Pass 2: output = adj @ support + bias
#   adj stays f32 in HBM (cast to bf16 per tile in-kernel), support is bf16.
#   Output tile (f32) is the accumulator: bias at k == 0, += partial products.
# ---------------------------------------------------------------------------
def _aggregate_kernel(adj_ref, s_ref, b_ref, o_ref, *, support_resident):
    k = pl.program_id(1)
    tk = adj_ref.shape[1]  # static

    if support_resident:
        # Full (N, f_out) support lives in VMEM; take the k-th (tk, f_out) slab.
        start = pl.multiple_of(k * tk, tk)
        s_tile = s_ref[pl.ds(start, tk), :]
    else:
        s_tile = s_ref[...]

    @pl.when(k == 0)
    def _():
        o_ref[...] = jnp.broadcast_to(b_ref[...], o_ref.shape)

    adj_bf = adj_ref[...].astype(jnp.bfloat16)
    o_ref[...] += jnp.dot(adj_bf, s_tile, preferred_element_type=jnp.float32)


def _pick_tile(dim, candidates=(512, 256, 128)):
    for t in candidates:
        if dim % t == 0:
            return t
    return dim  # non-multiple fallback: single full-extent block


def _pick_row_tile(dim):
    # Prefer the largest tile that still yields >= 2 row tiles so the "parallel"
    # axis can actually shard across v7x's two TensorCores.
    best = None
    for t in (512, 256, 128):
        if dim % t == 0:
            if best is None:
                best = t
            if dim // t >= 2:
                return t
    return best if best is not None else dim


def _vmem_limit_bytes():
    try:
        cap = int(pltpu.get_tpu_info().vmem_capacity_bytes)
    except Exception:
        cap = 64 * 1024 * 1024
    # Leave headroom: half of physical VMEM (64 MiB on v5e/v6e, 32 MiB on v7x).
    return max(32 * 1024 * 1024, min(cap // 2, 64 * 1024 * 1024))


def graph_convolution(x, adj, weight, bias=None):
    N, f_in = x.shape
    f_out = weight.shape[1]
    assert adj.shape == (N, N)
    assert f_in % 128 == 0 and f_out % 128 == 0, "feature dims must be lane-dense"

    tm = _pick_row_tile(N)      # output row tile (>= 2 tiles when possible)
    tk = _pick_tile(N)          # adj contraction tile (prefer 512)
    tn = _pick_tile(f_out)      # pass-1 output-feature tile
    vmem_limit = _vmem_limit_bytes()

    # Weight is tiny relative to x/adj: cast once to bf16.
    w_bf = weight.astype(jnp.bfloat16)
    if bias is None:
        bias2d = jnp.zeros((1, f_out), dtype=jnp.float32)
    else:
        bias2d = bias.reshape(1, f_out).astype(jnp.float32)

    # ---- Pass 1: support = x @ W  (row x f_out tiling, x cast in-kernel) ----
    n_jt = f_out // tn
    support = pl.pallas_call(
        _support_kernel,
        out_shape=jax.ShapeDtypeStruct((N, f_out), jnp.bfloat16),
        grid_spec=pltpu.PrefetchScalarGridSpec(
            num_scalar_prefetch=0,
            grid=(N // tm, n_jt),
            in_specs=[
                pl.BlockSpec((tm, f_in), lambda i, j: (i, 0)),   # x (f32)
                pl.BlockSpec((f_in, tn), lambda i, j: (0, j)),   # W (bf16)
            ],
            out_specs=pl.BlockSpec((tm, tn), lambda i, j: (i, j)),
        ),
        compiler_params=pltpu.CompilerParams(
            dimension_semantics=("parallel", "parallel"),
            vmem_limit_bytes=vmem_limit,
        ),
        cost_estimate=pl.CostEstimate(
            flops=2 * N * f_in * f_out,
            transcendentals=0,
            bytes_accessed=(N * f_in * 4 * n_jt        # x f32, re-read per j tile
                            + f_in * f_out * 2         # W bf16
                            + N * f_out * 2),          # support bf16 write
        ),
    )(x, w_bf)

    # ---- Pass 2: output = adj @ support + bias  (row-parallel, K-tiled) ----
    # Keep support fully VMEM-resident when its (double-buffered) footprint is small.
    support_resident = 2 * (N * f_out * 2) <= 8 * 1024 * 1024
    if support_resident:
        s_spec = pl.BlockSpec((N, f_out), lambda i, k: (0, 0))
        support_reads = 1
    else:
        s_spec = pl.BlockSpec((tk, f_out), lambda i, k: (k, 0))
        support_reads = N // tm

    out = pl.pallas_call(
        functools.partial(_aggregate_kernel, support_resident=support_resident),
        out_shape=jax.ShapeDtypeStruct((N, f_out), jnp.float32),
        grid_spec=pltpu.PrefetchScalarGridSpec(
            num_scalar_prefetch=0,
            grid=(N // tm, N // tk),
            in_specs=[
                pl.BlockSpec((tm, tk), lambda i, k: (i, k)),   # adj tile (f32)
                s_spec,                                        # support (bf16)
                pl.BlockSpec((1, f_out), lambda i, k: (0, 0)), # bias (resident)
            ],
            out_specs=pl.BlockSpec((tm, f_out), lambda i, k: (i, 0)),
        ),
        compiler_params=pltpu.CompilerParams(
            dimension_semantics=("parallel", "arbitrary"),
            vmem_limit_bytes=vmem_limit,
        ),
        cost_estimate=pl.CostEstimate(
            flops=2 * N * N * f_out,
            transcendentals=0,
            bytes_accessed=(N * N * 4                          # adj f32
                            + N * f_out * 2 * support_reads    # support bf16
                            + N * f_out * 4                    # output f32
                            + f_out * 4),                      # bias
        ),
    )(adj, support, bias2d)

    return out


if __name__ == "__main__":
    # Small but TPU-friendly shapes.
    N = 256          # number of graph nodes
    in_features = 128
    out_features = 128

    key = jax.random.PRNGKey(0)
    kx, kadj, kw, kb = jax.random.split(key, 4)

    x = jax.random.normal(kx, (N, in_features), dtype=jnp.float32)

    # Dense "sparse" adjacency (torch.spmm semantics == dense matmul result).
    adj_raw = (jax.random.uniform(kadj, (N, N)) < 0.05).astype(jnp.float32)
    adj = adj_raw + jnp.eye(N, dtype=jnp.float32)            # add self-loops
    deg = jnp.sum(adj, axis=1, keepdims=True)
    adj = adj / deg                                          # row-normalize

    # Deterministic parameter init mirroring reset_parameters():
    # uniform(-stdv, stdv), stdv = 1/sqrt(out_features).
    stdv = 1.0 / math.sqrt(out_features)
    weight = jax.random.uniform(
        kw, (in_features, out_features), minval=-stdv, maxval=stdv,
        dtype=jnp.float32)
    bias = jax.random.uniform(
        kb, (out_features,), minval=-stdv, maxval=stdv, dtype=jnp.float32)

    out = graph_convolution(x, adj, weight, bias)
    out = jax.block_until_ready(out)

    # Reference check in plain f32 JAX (kernel uses bf16 MXU operands with f32
    # accumulation, so tolerance is loosened accordingly).
    ref = adj @ (x @ weight) + bias
    assert out.shape == (N, out_features)
    assert jnp.allclose(out, ref, atol=3e-2, rtol=3e-2), "mismatch vs reference"

    print("KERNEL_OK")
</pallas_src>

<mosaic_0001>
module attributes {stable_mosaic.version = 11 : i64} {
  func.func @_support_kernel(%arg0: i32, %arg1: i32, %arg2: memref<128x128xf32, #tpu.memory_space<vmem>>, %arg3: memref<128x128xbf16, #tpu.memory_space<vmem>>, %arg4: memref<128x128xbf16, #tpu.memory_space<vmem>>) attributes {dimension_semantics = [#tpu.dimension_semantics<parallel>, #tpu.dimension_semantics<parallel>], iteration_bounds = array<i64: 2, 1>, scalar_prefetch = 0 : i64, scratch_operands = 0 : i64, tpu.core_type = #tpu.core_type<tc>, window_params = [{transform_indices = @transform_0, window_bounds = array<i64: 128, 128>}, {transform_indices = @transform_1, window_bounds = array<i64: 128, 128>}, {transform_indices = @transform_2, window_bounds = array<i64: 128, 128>}]} {
    %c0 = arith.constant 0 : index
    %c0_0 = arith.constant 0 : index
    %0 = vector.load %arg2[%c0, %c0_0] : memref<128x128xf32, #tpu.memory_space<vmem>>, vector<128x128xf32>
    %1 = arith.truncf %0 : vector<128x128xf32> to vector<128x128xbf16>
    %c0_1 = arith.constant 0 : index
    %c0_2 = arith.constant 0 : index
    %2 = vector.load %arg3[%c0_1, %c0_2] : memref<128x128xbf16, #tpu.memory_space<vmem>>, vector<128x128xbf16>
    %cst = arith.constant dense<0.000000e+00> : vector<128x128xf32>
    %3 = tpu.matmul %1, %2, %cst {dimension_numbers = #tpu.dot_dimension_numbers<[1], [0], [0], [1], [0, 0, 1, 1], [], []>} : vector<128x128xbf16>, vector<128x128xbf16>, vector<128x128xf32> -> vector<128x128xf32>
    %4 = arith.truncf %3 : vector<128x128xf32> to vector<128x128xbf16>
    %c0_3 = arith.constant 0 : index
    %c0_4 = arith.constant 0 : index
    %5 = vector.load %arg4[%c0_3, %c0_4] : memref<128x128xbf16, #tpu.memory_space<vmem>>, vector<128x128xbf16>
    tpu.vector_store %arg4[%c0_3, %c0_4], %4 {strides = array<i32>} : memref<128x128xbf16, #tpu.memory_space<vmem>>, vector<128x128xbf16>,
    return
  }
  func.func @transform_0(%arg0: i32, %arg1: i32) -> (i32, i32) {
    %c0_i32 = arith.constant 0 : i32
    %c0_i32_0 = arith.constant 0 : i32
    return %arg0, %c0_i32 : i32, i32
  }
  func.func @transform_1(%arg0: i32, %arg1: i32) -> (i32, i32) {
    %c0_i32 = arith.constant 0 : i32
    %c0_i32_0 = arith.constant 0 : i32
    return %c0_i32, %arg1 : i32, i32
  }
  func.func @transform_2(%arg0: i32, %arg1: i32) -> (i32, i32) {
    %c0_i32 = arith.constant 0 : i32
    return %arg0, %arg1 : i32, i32
  }
}

</mosaic_0001>

<llo_original>
// kernel: tpu_custom_call.1
$region0: #{tpu_custom_call.1}
  #allocation0 [shape = 'u32[]', space=smem, size = 0x4, offset = 0x4, fixed_abs, tag = 'smem constant byte address 0x4 - core index']
  #allocation1 [shape = 'u32[144,128]{1,0:T(1,128)}', space=vmem, size = 0x12000, scoped, tag = 'internal scratch']
  %s0 = inlined_call_operand.hbm [shape: f32[256,128], index: 0, kind: input, shape index: {}]
  %s1 = inlined_call_operand.hbm [shape: bf16[128,128], index: 1, kind: input, shape index: {}]
  %s2 = inlined_call_operand.hbm [shape: bf16[256,128], index: 2, kind: output, shape index: {}]
  %s3 = sld [smem:[#allocation0]]
  $region49: #{tpu_custom_call.1} parent=0
    _
  %s5 = ssub.s32 1, %s3
  %s6 = scalar_select 0, %s5, %s3
  $region1: #{tpu_custom_call.1} parent=0
    #allocation2 [shape = 'u8[131072]{0}', space=vmem, size = 0x20000, scoped, tag = 'input window, operand 0']
    #allocation3 [shape = 's32[2]{0}', space=sflag, size = 0x8, scoped, tag = 'scoped memory for tpu_custom_call.1']
    #allocation4 [shape = 's32[2]{0}', space=sflag, size = 0x8, scoped, tag = 'scoped memory for tpu_custom_call.1']
    #allocation5 [shape = 'u8[32768]{0}', space=vmem, size = 0x8000, scoped, tag = 'input window, operand 1, single buffered']
    #allocation6 [shape = 's32[1]{0}', space=sflag, size = 0x4, scoped, tag = 'scoped memory for tpu_custom_call.1']
    #allocation7 [shape = 'u8[65536]{0}', space=vmem, size = 0x10000, scoped, tag = 'output window, operand 0']
    %7 = vsyncpa [#allocation3], 0
    %s8 = scalar_lea.sflag [#allocation3], 1
    %9 = vsyncpa %s8, 0
    %10 = vsyncpa [#allocation6], 0
    %11 = vsyncpa [#allocation4], 0
    %s12 = scalar_lea.sflag [#allocation4], 1
    %13 = vsyncpa %s12, 0
    loop: start=0, step=1, limit=4
    $region2: #{tpu_custom_call.1} parent=1 // loop_pre_header
      _
    $region3: #{tpu_custom_call.1} parent=1 // loop_header
      %s15 = sphi 0, %s19
      %p16 = scmp.ge.s32.totalorder %s15, 4
      %s22 = sphi 0, %s34
      %s23 = sphi 0, %s30
      %s24 = sphi 0, %s22
      %s25 = sphi 0, %s23
      %s26 = sphi 0, %s24
      %s27 = sphi 0, %s25
      %s37 = sphi 0, %s39
      %s40 = sphi 0, %s37
      %s41 = sphi 0, %s40
      %s57 = sphi 0, %s41
      %s63 = sphi 0, %s65
      %s66 = sphi 0, %s63
      %s67 = sphi 0, %s66
      %s83 = sphi 0, %s67
      %s91 = sphi 0, %s93
      %s94 = sphi 0, %s91
      %s95 = sphi 0, %s94
      %s111 = sphi 0, %s95
    $region4: #{tpu_custom_call.1} parent=1 // loop_header_branch
      %18 = sbr.rel (%p16) target = $region8
    $region5: #{tpu_custom_call.1} parent=1 // loop_body
      %s20 = ssub.s32 %s15, 1
      %s21 = ssub.s32 %s15, 2
      %s28 = sadd.s32 1, %s23
      %p29 = scmp.ge.s32.totalorder %s28, 1
      %s30 = scalar_select %p29, 0, %s28
      %s31 = sadd.s32 1, %s22
      %s32 = scalar_select %p29, %s31, %s22
      %p33 = scmp.ge.s32.totalorder %s32, 2
      %s34 = scalar_select %p33, 0, %s32
      %s35 = ssub.s32 %s22, %s34
      %p36 = scmp.eq.s32.totalorder %s35, 0
      %s38 = sadd.s32 %s37, 1
      %s39 = scalar_select %p36, %s37, %s38
      %p42 = pneg %p36
      %p43 = scmp.eq.s32.totalorder %s15, 1
      %p44 = por %p42, %p43
      %p45 = scmp.ne.s32.totalorder %s37, %s40
      %p46 = scmp.eq.s32.totalorder %s15, 0
      %p47 = por %p45, %p46
      %p48 = scmp.ne.s32.totalorder %s37, %s40
      %p49 = scmp.eq.s32.totalorder %s20, 1
      %p50 = por %p48, %p49
      %p51 = scmp.ne.s32.totalorder %s40, %s41
      %p52 = scmp.eq.s32.totalorder %s20, 0
      %p53 = por %p51, %p52
      %p54 = scmp.ne.s32.totalorder %s40, %s41
      %p55 = scmp.eq.s32.totalorder %s21, 1
      %p56 = por %p54, %p55
      %p58 = scmp.ne.s32.totalorder %s41, %s57
      %p59 = scmp.eq.s32.totalorder %s21, 0
      %p60 = por %p58, %p59
      %s61 = ssub.s32 %s23, %s30
      %p62 = scmp.eq.s32.totalorder %s61, 0
      %s64 = sadd.s32 %s63, 1
      %s65 = scalar_select %p62, %s63, %s64
      %p68 = pneg %p62
      %p69 = scmp.eq.s32.totalorder %s15, 1
      %p70 = por %p68, %p69
      %p71 = scmp.ne.s32.totalorder %s63, %s66
      %p72 = scmp.eq.s32.totalorder %s15, 0
      %p73 = por %p71, %p72
      %p74 = scmp.ne.s32.totalorder %s63, %s66
      %p75 = scmp.eq.s32.totalorder %s20, 1
      %p76 = por %p74, %p75
      %p77 = scmp.ne.s32.totalorder %s66, %s67
      %p78 = scmp.eq.s32.totalorder %s20, 0
      %p79 = por %p77, %p78
      %p80 = scmp.ne.s32.totalorder %s66, %s67
      %p81 = scmp.eq.s32.totalorder %s21, 1
      %p82 = por %p80, %p81
      %p84 = scmp.ne.s32.totalorder %s67, %s83
      %p85 = scmp.eq.s32.totalorder %s21, 0
      %p86 = por %p84, %p85
      %s87 = ssub.s32 %s22, %s34
      %s88 = ssub.s32 %s23, %s30
      %s89 = sor.u32 %s87, %s88
      %p90 = scmp.eq.s32.totalorder %s89, 0
      %s92 = sadd.s32 %s91, 1
      %s93 = scalar_select %p90, %s91, %s92
      %p96 = pneg %p90
      %p97 = scmp.eq.s32.totalorder %s15, 1
      %p98 = por %p96, %p97
      %p99 = scmp.ne.s32.totalorder %s91, %s94
      %p100 = scmp.eq.s32.totalorder %s15, 0
      %p101 = por %p99, %p100
      %p102 = scmp.ne.s32.totalorder %s91, %s94
      %p103 = scmp.eq.s32.totalorder %s20, 1
      %p104 = por %p102, %p103
      %p105 = scmp.ne.s32.totalorder %s94, %s95
      %p106 = scmp.eq.s32.totalorder %s20, 0
      %p107 = por %p105, %p106
      %p108 = scmp.ne.s32.totalorder %s94, %s95
      %p109 = scmp.eq.s32.totalorder %s21, 1
      %p110 = por %p108, %p109
      %p112 = scmp.ne.s32.totalorder %s95, %s111
      %p113 = scmp.eq.s32.totalorder %s21, 0
      %p114 = por %p112, %p113
      %p115 = scmp.le.s32.totalorder 1, %s15
      %p116 = scmp.lt.s32.totalorder %s15, 3
      %p117 = pnand %p115, %p116
      %p118 = pneg %p117
      // Predicated region
      $region9: #{tpu_custom_call.1} parent=5 // pred_check
        _
      $region10: #{tpu_custom_call.1} parent=5 // pred_check_branch
        %120 = sbr.rel (%p117) target = $region12
      $region11: #{tpu_custom_call.1} parent=5 // pred_region
        %s121 = ssub.s32 %s15, 1
        // Predicated region
        $region13: #{tpu_custom_call.1} parent=11 // pred_check
          %p122 = pneg %p79
        $region14: #{tpu_custom_call.1} parent=11 // pred_check_branch
          %124 = sbr.rel (%p122) target = $region16
        $region15: #{tpu_custom_call.1} parent=11 // pred_region
          %s126 = ssub.s32 1024, 1024
          %127 = vsyncadd [#allocation6], %s126
          %s128 = smul.addr %s25, 64
          %s129 = scalar_lea.hbm %s1, %s128
          %s130 = sshll.u32 [#allocation5], 4
          %s131 = int_to_ptr.vmem [resolvable:$true] %s130
          %136 = dma.hbm_to_vmem [thread:$0]  %s129, 1024, %s131, [#allocation6], 64, 64, 4
        $region16: #{tpu_custom_call.1} parent=11 // pred_fallthru
          _
      $region12: #{tpu_custom_call.1} parent=5 // pred_fallthru
        _
      %p137 = scmp.lt.s32.totalorder %s15, 2
      // Predicated region
      $region17: #{tpu_custom_call.1} parent=5 // pred_check
        %p138 = pneg %p137
      $region18: #{tpu_custom_call.1} parent=5 // pred_check_branch
        %140 = sbr.rel (%p138) target = $region20
      $region19: #{tpu_custom_call.1} parent=5 // pred_region
        // Predicated region
        $region21: #{tpu_custom_call.1} parent=19 // pred_check
          %p141 = pneg %p47
        $region22: #{tpu_custom_call.1} parent=19 // pred_check_branch
          %143 = sbr.rel (%p141) target = $region24
        $region23: #{tpu_custom_call.1} parent=19 // pred_region
          %s144 = sand.u32 %s37, 1
          %s145 = scalar_lea.sflag [#allocation3], %s144
          %s146 = sand.u32 %s37, 1
          %s147 = smul.addr %s146, 128
          %s148 = scalar_lea.vmem [#allocation2], %s147
          %s149 = smul.u32 16, %s22
          %s151 = ssub.s32 2048, 2048
          %152 = vsyncadd %s145, %s151
          %s153 = smul.addr %s149, 128
          %s154 = scalar_lea.hbm %s0, %s153
          %s155 = sshll.u32 %s148, 4
          %s156 = int_to_ptr.vmem [resolvable:$true] %s155
          %161 = dma.hbm_to_vmem [thread:$0]  %s154, 2048, %s156, %s145, 128, 128, 8
        $region24: #{tpu_custom_call.1} parent=19 // pred_fallthru
          _
      $region20: #{tpu_custom_call.1} parent=5 // pred_fallthru
        _
      %p162 = scmp.le.s32.totalorder 1, %s15
      %p163 = scmp.lt.s32.totalorder %s15, 3
      %p164 = pnand %p162, %p163
      %p165 = pneg %p164
      // Predicated region
      $region25: #{tpu_custom_call.1} parent=5 // pred_check
        _
      $region26: #{tpu_custom_call.1} parent=5 // pred_check_branch
        %167 = sbr.rel (%p164) target = $region28
      $region27: #{tpu_custom_call.1} parent=5 // pred_region
        %s168 = ssub.s32 %s15, 1
        %s169 = sand.u32 %s40, 1
        %s170 = scalar_lea.sflag [#allocation3], %s169
        %s171 = sand.u32 %s40, 1
        %s172 = smul.addr %s171, 128
        %s173 = scalar_lea.vmem [#allocation2], %s172
        // Predicated region
        $region29: #{tpu_custom_call.1} parent=27 // pred_check
          %p174 = pneg %p53
        $region30: #{tpu_custom_call.1} parent=27 // pred_check_branch
          %176 = sbr.rel (%p174) target = $region32
        $region31: #{tpu_custom_call.1} parent=27 // pred_region
          %177 = dma.done %s170, 2048
        $region32: #{tpu_custom_call.1} parent=27 // pred_fallthru
          _
        // Predicated region
        $region33: #{tpu_custom_call.1} parent=27 // pred_check
          %p178 = pneg %p79
        $region34: #{tpu_custom_call.1} parent=27 // pred_check_branch
          %180 = sbr.rel (%p178) target = $region36
        $region35: #{tpu_custom_call.1} parent=27 // pred_region
          %181 = dma.done [#allocation6], 1024
        $region36: #{tpu_custom_call.1} parent=27 // pred_fallthru
          _
        %s182 = sand.u32 %s40, 1
        %s183 = scalar_lea.sflag [#allocation3], %s182
        %s184 = sand.u32 %s40, 1
        %s185 = smul.addr %s184, 128
        %s186 = scalar_lea.vmem [#allocation2], %s185
        %p187 = pneg %p53
        %p188 = pneg %p50
        %p189 = pneg %p79
        %p190 = pneg %p76
        %p191 = pneg %p107
        %p192 = pneg %p104
        %s193 = sand.u32 %s94, 1
        %s194 = scalar_lea.sflag [#allocation4], %s193
        %s195 = sand.u32 %s94, 1
        %s196 = smul.addr %s195, 64
        %s197 = scalar_lea.vmem [#allocation7], %s196
        %s198 = smul.u32 16, %s24
        %s199 = smul.u32 16, %s24
        %v201 = vld [vmem:[%s173] sm:$0xff]
        %v202 = vld [vmem:[%s173 + $0x8] sm:$0xff]
        %v203 = vld [vmem:[%s173 + $0x10] sm:$0xff]
        %v204 = vld [vmem:[%s173 + $0x18] sm:$0xff]
        %v205 = vld [vmem:[%s173 + $0x20] sm:$0xff]
        %v206 = vld [vmem:[%s173 + $0x28] sm:$0xff]
        %v207 = vld [vmem:[%s173 + $0x30] sm:$0xff]
        %v208 = vld [vmem:[%s173 + $0x38] sm:$0xff]
        %v209 = vld [vmem:[%s173 + $0x40] sm:$0xff]
        %v210 = vld [vmem:[%s173 + $0x48] sm:$0xff]
        %v211 = vld [vmem:[%s173 + $0x50] sm:$0xff]
        %v212 = vld [vmem:[%s173 + $0x58] sm:$0xff]
        %v213 = vld [vmem:[%s173 + $0x60] sm:$0xff]
        %v214 = vld [vmem:[%s173 + $0x68] sm:$0xff]
        %v215 = vld [vmem:[%s173 + $0x70] sm:$0xff]
        %v216 = vld [vmem:[%s173 + $0x78] sm:$0xff]
        %v217 = vpack.c.bf16 %v202, %v201
        %v218 = vpack.c.bf16 %v204, %v203
        %v219 = vpack.c.bf16 %v206, %v205
        %v220 = vpack.c.bf16 %v208, %v207
        %v221 = vpack.c.bf16 %v210, %v209
        %v222 = vpack.c.bf16 %v212, %v211
        %v223 = vpack.c.bf16 %v214, %v213
        %v224 = vpack.c.bf16 %v216, %v215
        %v225 = vld [vmem:[#allocation5] sm:$0xf]
        %v226 = vld [vmem:[#allocation5 + $0x4] sm:$0xf]
        %v227 = vld [vmem:[#allocation5 + $0x8] sm:$0xf]
        %v228 = vld [vmem:[#allocation5 + $0xc] sm:$0xf]
        %v229 = vld [vmem:[#allocation5 + $0x10] sm:$0xf]
        %v230 = vld [vmem:[#allocation5 + $0x14] sm:$0xf]
        %v231 = vld [vmem:[#allocation5 + $0x18] sm:$0xf]
        %v232 = vld [vmem:[#allocation5 + $0x1c] sm:$0xf]
        %v233 = vld [vmem:[#allocation5 + $0x20] sm:$0xf]
        %v234 = vld [vmem:[#allocation5 + $0x24] sm:$0xf]
        %v235 = vld [vmem:[#allocation5 + $0x28] sm:$0xf]
        %v236 = vld [vmem:[#allocation5 + $0x2c] sm:$0xf]
        %v237 = vld [vmem:[#allocation5 + $0x30] sm:$0xf]
        %v238 = vld [vmem:[#allocation5 + $0x34] sm:$0xf]
        %v239 = vld [vmem:[#allocation5 + $0x38] sm:$0xf]
        %v240 = vld [vmem:[#allocation5 + $0x3c] sm:$0xf]
        %v257 = vunpack.c.l.b16 %v225
        %v258 = vunpack.c.l.b16 %v226
        %v259 = vunpack.c.l.b16 %v227
        %v260 = vunpack.c.l.b16 %v228
        %v261 = vunpack.c.l.b16 %v229
        %v262 = vunpack.c.l.b16 %v230
        %v263 = vunpack.c.l.b16 %v231
        %v264 = vunpack.c.l.b16 %v232
        %v265 = vunpack.c.l.b16 %v233
        %v266 = vunpack.c.l.b16 %v234
        %v267 = vunpack.c.l.b16 %v235
        %v268 = vunpack.c.l.b16 %v236
        %v269 = vunpack.c.l.b16 %v237
        %v270 = vunpack.c.l.b16 %v238
        %v271 = vunpack.c.l.b16 %v239
        %v272 = vunpack.c.l.b16 %v240
        %v273 = vpack.c.b16 %v258, %v257
        %v274 = vpack.c.b16 %v260, %v259
        %v275 = vpack.c.b16 %v262, %v261
        %v276 = vpack.c.b16 %v264, %v263
        %v277 = vpack.c.b16 %v266, %v265
        %v278 = vpack.c.b16 %v268, %v267
        %v279 = vpack.c.b16 %v270, %v269
        %v280 = vpack.c.b16 %v272, %v271
        %289 = vmatprep.subr.bf16.mxu0 0
        %290 = vmatpush1.bf16.msra.mxu0 %v280
        %291 = vmatprep.subr.bf16.mxu0 0
        %292 = vmatpush1.bf16.msra.mxu0 %v279
        %293 = vmatprep.subr.bf16.mxu0 0
        %294 = vmatpush1.bf16.msra.mxu0 %v278
        %295 = vmatprep.subr.bf16.mxu0 0
        %296 = vmatpush1.bf16.msra.mxu0 %v277
        %297 = vmatprep.subr.bf16.mxu0 0
        %298 = vmatpush1.bf16.msra.mxu0 %v276
        %299 = vmatprep.subr.bf16.mxu0 0
        %300 = vmatpush1.bf16.msra.mxu0 %v275
        %301 = vmatprep.subr.bf16.mxu0 0
        %302 = vmatpush1.bf16.msra.mxu0 %v274
        %303 = vmatprep.subr.bf16.mxu0 0
        %304 = vmatpush1.bf16.msra.mxu0 %v273
        %305 = vmatprep.subr.bf16.mxu0 0
        %306 = vmatpush2.bf16.msra.mxu0 0
        %307 = vmatprep.subr.bf16.mxu0 0
        %308 = vmatpush2.bf16.msra.mxu0 0
        %309 = vmatprep.subr.bf16.mxu0 0
        %310 = vmatpush2.bf16.msra.mxu0 0
        %311 = vmatprep.subr.bf16.mxu0 0
        %312 = vmatpush2.bf16.msra.mxu0 0
        %313 = vmatprep.subr.bf16.mxu0 0
        %314 = vmatpush2.bf16.msra.mxu0 0
        %315 = vmatprep.subr.bf16.mxu0 0
        %316 = vmatpush2.bf16.msra.mxu0 0
        %317 = vmatprep.subr.bf16.mxu0 0
        %318 = vmatpush2.bf16.msra.mxu0 0
        %319 = vmatprep.subr.bf16.mxu0 0
        %320 = vmatpush2.bf16.msra.mxu0 0
        %321 = vmatprep.mubr.bf16.mxu0 0
        %322 = vmatmul.mubr.bf16.gmra.mxu0 %v217
        %v323 = vpop.f32.mrf.mxu0
        %v324 = vadd.f32 0.0, %v323
        %v325 = vpop.f32.mrf.mxu0
        %v326 = vpop.f32.mrf.mxu0
        %v327 = vadd.f32 0.0, %v326
        %v328 = vpop.f32.mrf.mxu0
        %329 = vmatprep.mubr.bf16.mxu0 0
        %330 = vmatmul.mubr.bf16.gmra.mxu0 %v218
        %v331 = vpop.f32.mrf.mxu0
        %v332 = vadd.f32 0.0, %v331
        %v333 = vpop.f32.mrf.mxu0
        %v334 = vpop.f32.mrf.mxu0
        %v335 = vadd.f32 0.0, %v334
        %v336 = vpop.f32.mrf.mxu0
        %337 = vmatprep.mubr.bf16.mxu0 0
        %338 = vmatmul.mubr.bf16.gmra.mxu0 %v219
        %v339 = vpop.f32.mrf.mxu0
        %v340 = vadd.f32 0.0, %v339
        %v341 = vpop.f32.mrf.mxu0
        %v342 = vpop.f32.mrf.mxu0
        %v343 = vadd.f32 0.0, %v342
        %v344 = vpop.f32.mrf.mxu0
        %345 = vmatprep.mubr.bf16.mxu0 0
        %346 = vmatmul.mubr.bf16.gmra.mxu0 %v220
        %v347 = vpop.f32.mrf.mxu0
        %v348 = vadd.f32 0.0, %v347
        %v349 = vpop.f32.mrf.mxu0
        %v350 = vpop.f32.mrf.mxu0
        %v351 = vadd.f32 0.0, %v350
        %v352 = vpop.f32.mrf.mxu0
        %353 = vmatprep.mubr.bf16.mxu0 0
        %354 = vmatmul.mubr.bf16.gmra.mxu0 %v221
        %v355 = vpop.f32.mrf.mxu0
        %v356 = vadd.f32 0.0, %v355
        %v357 = vpop.f32.mrf.mxu0
        %v358 = vpop.f32.mrf.mxu0
        %v359 = vadd.f32 0.0, %v358
        %v360 = vpop.f32.mrf.mxu0
        %361 = vmatprep.mubr.bf16.mxu0 0
        %362 = vmatmul.mubr.bf16.gmra.mxu0 %v222
        %v363 = vpop.f32.mrf.mxu0
        %v364 = vadd.f32 0.0, %v363
        %v365 = vpop.f32.mrf.mxu0
        %v366 = vpop.f32.mrf.mxu0
        %v367 = vadd.f32 0.0, %v366
        %v368 = vpop.f32.mrf.mxu0
        %369 = vmatprep.mubr.bf16.mxu0 0
        %370 = vmatmul.mubr.bf16.gmra.mxu0 %v223
        %v371 = vpop.f32.mrf.mxu0
        %v372 = vadd.f32 0.0, %v371
        %v373 = vpop.f32.mrf.mxu0
        %v374 = vpop.f32.mrf.mxu0
        %v375 = vadd.f32 0.0, %v374
        %v376 = vpop.f32.mrf.mxu0
        %377 = vmatprep.mubr.bf16.mxu0 0
        %378 = vmatmul.mubr.bf16.gmra.mxu0 %v224
        %v379 = vpop.f32.mrf.mxu0
        %v380 = vadd.f32 0.0, %v379
        %v381 = vpop.f32.mrf.mxu0
        %v382 = vpop.f32.mrf.mxu0
        %v383 = vadd.f32 0.0, %v382
        %v384 = vpop.f32.mrf.mxu0
        %385 = vdwg.mxu0
        %v386 = vpack.c.bf16 %v327, %v324
        %v387 = vpack.c.bf16 %v335, %v332
        %v388 = vpack.c.bf16 %v343, %v340
        %v389 = vpack.c.bf16 %v351, %v348
        %v390 = vpack.c.bf16 %v359, %v356
        %v391 = vpack.c.bf16 %v367, %v364
        %v392 = vpack.c.bf16 %v375, %v372
        %v393 = vpack.c.bf16 %v383, %v380
        %v402 = vunpack.c.l.b16 %v386
        %v403 = vunpack.c.h.b16 %v386
        %v404 = vunpack.c.l.b16 %v387
        %v405 = vunpack.c.h.b16 %v387
        %v406 = vunpack.c.l.b16 %v388
        %v407 = vunpack.c.h.b16 %v388
        %v408 = vunpack.c.l.b16 %v389
        %v409 = vunpack.c.h.b16 %v389
        %v410 = vunpack.c.l.b16 %v390
        %v411 = vunpack.c.h.b16 %v390
        %v412 = vunpack.c.l.b16 %v391
        %v413 = vunpack.c.h.b16 %v391
        %v414 = vunpack.c.l.b16 %v392
        %v415 = vunpack.c.h.b16 %v392
        %v416 = vunpack.c.l.b16 %v393
        %v417 = vunpack.c.h.b16 %v393
        %v418 = vpack.c.b16 %v402, %v402
        %v419 = vpack.c.b16 %v403, %v403
        %v420 = vpack.c.b16 %v404, %v404
        %v421 = vpack.c.b16 %v405, %v405
        %v422 = vpack.c.b16 %v406, %v406
        %v423 = vpack.c.b16 %v407, %v407
        %v424 = vpack.c.b16 %v408, %v408
        %v425 = vpack.c.b16 %v409, %v409
        %v426 = vpack.c.b16 %v410, %v410
        %v427 = vpack.c.b16 %v411, %v411
        %v428 = vpack.c.b16 %v412, %v412
        %v429 = vpack.c.b16 %v413, %v413
        %v430 = vpack.c.b16 %v414, %v414
        %v431 = vpack.c.b16 %v415, %v415
        %v432 = vpack.c.b16 %v416, %v416
        %v433 = vpack.c.b16 %v417, %v417
        %450 = vst [vmem:[%s197] sm:$0xf] %v418
        %451 = vst [vmem:[%s197 + $0x4] sm:$0xf] %v419
        %452 = vst [vmem:[%s197 + $0x8] sm:$0xf] %v420
        %453 = vst [vmem:[%s197 + $0xc] sm:$0xf] %v421
        %454 = vst [vmem:[%s197 + $0x10] sm:$0xf] %v422
        %455 = vst [vmem:[%s197 + $0x14] sm:$0xf] %v423
        %456 = vst [vmem:[%s197 + $0x18] sm:$0xf] %v424
        %457 = vst [vmem:[%s197 + $0x1c] sm:$0xf] %v425
        %458 = vst [vmem:[%s197 + $0x20] sm:$0xf] %v426
        %459 = vst [vmem:[%s197 + $0x24] sm:$0xf] %v427
        %460 = vst [vmem:[%s197 + $0x28] sm:$0xf] %v428
        %461 = vst [vmem:[%s197 + $0x2c] sm:$0xf] %v429
        %462 = vst [vmem:[%s197 + $0x30] sm:$0xf] %v430
        %463 = vst [vmem:[%s197 + $0x34] sm:$0xf] %v431
        %464 = vst [vmem:[%s197 + $0x38] sm:$0xf] %v432
        %465 = vst [vmem:[%s197 + $0x3c] sm:$0xf] %v433
        %s466 = sand.u32 %s94, 1
        %s467 = scalar_lea.sflag [#allocation4], %s466
        %s468 = sand.u32 %s94, 1
        %s469 = smul.addr %s468, 64
        %s470 = scalar_lea.vmem [#allocation7], %s469
        // Predicated region
        $region37: #{tpu_custom_call.1} parent=27 // pred_check
          %p471 = pneg %p104
        $region38: #{tpu_custom_call.1} parent=27 // pred_check_branch
          %473 = sbr.rel (%p471) target = $region40
        $region39: #{tpu_custom_call.1} parent=27 // pred_region
          %s474 = smul.u32 16, %s24
          %s476 = ssub.s32 1024, 1024
          %477 = vsyncadd %s467, %s476
          %s478 = sadd.s32 %s25, %s474
          %s479 = smul.addr %s478, 64
          %s480 = scalar_lea.hbm %s2, %s479
          %s481 = sshll.u32 %s470, 4
          %s482 = int_to_ptr.vmem [resolvable:$true] %s481
          %487 = dma.vmem_to_hbm [thread:$0]  %s482, 1024, %s480, %s467, 64, 64, 4
        $region40: #{tpu_custom_call.1} parent=27 // pred_fallthru
          _
      $region28: #{tpu_custom_call.1} parent=5 // pred_fallthru
        _
      %p488 = scmp.le.s32.totalorder 2, %s15
      // Predicated region
      $region41: #{tpu_custom_call.1} parent=5 // pred_check
        %p489 = pneg %p488
      $region42: #{tpu_custom_call.1} parent=5 // pred_check_branch
        %491 = sbr.rel (%p489) target = $region44
      $region43: #{tpu_custom_call.1} parent=5 // pred_region
        %s492 = ssub.s32 %s15, 2
        // Predicated region
        $region45: #{tpu_custom_call.1} parent=43 // pred_check
          %p493 = pneg %p110
        $region46: #{tpu_custom_call.1} parent=43 // pred_check_branch
          %495 = sbr.rel (%p493) target = $region48
        $region47: #{tpu_custom_call.1} parent=43 // pred_region
          %s496 = sand.u32 %s95, 1
          %s497 = scalar_lea.sflag [#allocation4], %s496
          %s498 = sand.u32 %s95, 1
          %s499 = smul.addr %s498, 64
          %s500 = scalar_lea.vmem [#allocation7], %s499
          %501 = dma.done %s497, 1024
        $region48: #{tpu_custom_call.1} parent=43 // pred_fallthru
          _
      $region44: #{tpu_custom_call.1} parent=5 // pred_fallthru
        _
    $region6: #{tpu_custom_call.1} parent=1 // loop_footer
      %s19 = sadd.s32 1, %s15
    $region7: #{tpu_custom_call.1} parent=1 // loop_footer_branch
      %14 = sbr.rel target = $region3
    $region8: #{tpu_custom_call.1} parent=1 // loop_exit
      _
    %502 = vsyncpa [#allocation3], 1
    %s503 = scalar_lea.sflag [#allocation3], 1
    %504 = vsyncpa %s503, 1
    %505 = vsyncpa [#allocation6], 1
    %506 = vsyncpa [#allocation4], 1
    %s507 = scalar_lea.sflag [#allocation4], 1
    %508 = vsyncpa %s507, 1

</llo_original>
